<compile_context>
chip_gen: v7x
topology: tpu7x:2x2x1
jax: 0.10.0
libtpu: 0.0.40
codegen_flags: <defaults>
</compile_context>

<pallas_src>
import functools

import jax
import jax.numpy as jnp
from jax.experimental import pallas as pl
from jax.experimental.pallas import tpu as pltpu


def _conv_relu_kernel(x_ref, w_ref, o_ref, *, kh, ho):
    # x_ref: (Hp, Wp*Cin)           padded, width-flattened image (one batch elem)
    # w_ref: (KH, Wp*Cin, Wo*Cout)  width-folded weights
    # o_ref: (Ho, Wo*Cout)          lane-dense output rows
    acc = jnp.zeros(o_ref.shape, jnp.float32)
    # Small static loop (KH taps): each tap is one clean 2-D MXU matmul with
    # K = Wp*Cin and a lane-dense N = Wo*Cout output.
    for i in range(kh):
        acc = acc + jnp.dot(x_ref[i:i + ho, :], w_ref[i],
                            preferred_element_type=jnp.float32)
    # Fused ReLU on full-width vregs, unmasked lane-dense store.
    o_ref[...] = jnp.maximum(acc, 0.0).astype(o_ref.dtype)


def basic_forward(x_nchw, w_oihw, padding=0):
    """Equivalent of Basic.forward: relu(conv2d(x, w, padding=padding, bias=False))."""
    n, cin, h, w = x_nchw.shape
    cout, cin_w, kh, kw = w_oihw.shape
    assert cin == cin_w, "groups=1 conv requires matching channel counts"
    hp, wp = h + 2 * padding, w + 2 * padding
    ho, wo = hp - kh + 1, wp - kw + 1

    # ---- glue (layout only): NCHW -> (N, Hp, Wp*Cin) ----
    x_nhwc = jnp.transpose(x_nchw, (0, 2, 3, 1))
    x_pad = jnp.pad(x_nhwc, ((0, 0), (padding, padding), (padding, padding), (0, 0)))
    x2 = x_pad.reshape(n, hp, wp * cin)

    # ---- glue: fold the width taps into the weights ----
    # wbig[i, pw*cin + c, w*cout + f] = W[f, c, i, pw - w]  when 0 <= pw - w < kw, else 0
    w_hwcf = jnp.transpose(w_oihw, (2, 3, 1, 0))                       # (kh, kw, cin, cout)
    pw_idx = jnp.arange(wp)
    w_idx = jnp.arange(wo)
    j_idx = jnp.arange(kw)
    onehot = (pw_idx[None, :, None] ==
              (w_idx[None, None, :] + j_idx[:, None, None])).astype(w_hwcf.dtype)  # (kw, wp, wo)
    wbig = jnp.einsum('jpw,ijcf->ipcwf', onehot, w_hwcf).reshape(kh, wp * cin, wo * cout)

    kernel = functools.partial(_conv_relu_kernel, kh=kh, ho=ho)

    out2 = pl.pallas_call(
        kernel,
        out_shape=jax.ShapeDtypeStruct((n, ho, wo * cout), x_nchw.dtype),
        grid=(n,),  # one grid step per batch element; shards across v7x TCs
        in_specs=[
            pl.BlockSpec((None, hp, wp * cin), lambda b: (b, 0, 0)),
            pl.BlockSpec((kh, wp * cin, wo * cout), lambda b: (0, 0, 0)),
        ],
        out_specs=pl.BlockSpec((None, ho, wo * cout), lambda b: (b, 0, 0)),
        compiler_params=pltpu.CompilerParams(
            dimension_semantics=("parallel",)),
    )(x2, wbig)

    # ---- glue: (N, Ho, Wo*Cout) -> NCHW ----
    return jnp.transpose(out2.reshape(n, ho, wo, cout), (0, 3, 1, 2))


def _reference(x_nchw, w_oihw, padding):
    y = jax.lax.conv_general_dilated(
        x_nchw, w_oihw,
        window_strides=(1, 1),
        padding=[(padding, padding), (padding, padding)],
        dimension_numbers=('NCHW', 'OIHW', 'NCHW'))
    return jnp.maximum(y, 0.0)


if __name__ == "__main__":
    # Basic(in_planes=4, out_planes=8, kernel_size=3, padding=1, bias=False)
    N, CIN, H, W = 2, 4, 16, 16
    COUT, KH, KW = 8, 3, 3
    PAD = 1

    key = jax.random.PRNGKey(0)
    kx, kw_ = jax.random.split(key)
    x = jax.random.normal(kx, (N, CIN, H, W), dtype=jnp.float32)
    # Deterministic synthetic weights (OIHW, as in nn.Conv2d).
    weight = jax.random.normal(kw_, (COUT, CIN, KH, KW), dtype=jnp.float32) * 0.1

    out = basic_forward(x, weight, padding=PAD)
    out = jax.block_until_ready(out)

    ref = jax.block_until_ready(_reference(x, weight, PAD))
    assert out.shape == (N, COUT, H, W), out.shape
    assert jnp.allclose(out, ref, atol=1e-4, rtol=1e-4), "mismatch vs reference conv"

    print("KERNEL_OK")
</pallas_src>

<mosaic_0001>
module attributes {stable_mosaic.version = 11 : i64} {
  func.func @_conv_relu_kernel(%arg0: i32, %arg1: memref<1x18x72xf32, #tpu.memory_space<vmem>>, %arg2: memref<3x72x128xf32, #tpu.memory_space<vmem>>, %arg3: memref<1x16x128xf32, #tpu.memory_space<vmem>>) attributes {dimension_semantics = [#tpu.dimension_semantics<parallel>], iteration_bounds = array<i64: 2>, scalar_prefetch = 0 : i64, scratch_operands = 0 : i64, tpu.core_type = #tpu.core_type<tc>, window_params = [{transform_indices = @transform_0, window_bounds = array<i64: 1, 18, 72>}, {pipeline_mode = #tpu.pipeline_mode<synchronous>, transform_indices = @transform_1, window_bounds = array<i64: 3, 72, 128>}, {transform_indices = @transform_2, window_bounds = array<i64: 1, 16, 128>}]} {
    %cst = arith.constant 0.000000e+00 : f32
    %0 = vector.broadcast %cst : f32 to vector<16x128xf32>
    %c0 = arith.constant 0 : index
    %c0_0 = arith.constant 0 : index
    %c0_1 = arith.constant 0 : index
    %1 = vector.load %arg1[%c0, %c0_0, %c0_1] : memref<1x18x72xf32, #tpu.memory_space<vmem>>, vector<1x16x72xf32>
    %2 = vector.shape_cast %1 : vector<1x16x72xf32> to vector<16x72xf32>
    %c0_2 = arith.constant 0 : index
    %c0_3 = arith.constant 0 : index
    %c0_4 = arith.constant 0 : index
    %3 = vector.load %arg2[%c0_2, %c0_3, %c0_4] : memref<3x72x128xf32, #tpu.memory_space<vmem>>, vector<1x72x128xf32>
    %4 = vector.shape_cast %3 : vector<1x72x128xf32> to vector<72x128xf32>
    %cst_5 = arith.constant dense<0.000000e+00> : vector<16x128xf32>
    %5 = tpu.matmul %2, %4, %cst_5 {dimension_numbers = #tpu.dot_dimension_numbers<[1], [0], [0], [1], [0, 0, 1, 1], [], []>} : vector<16x72xf32>, vector<72x128xf32>, vector<16x128xf32> -> vector<16x128xf32>
    %6 = arith.addf %0, %5 : vector<16x128xf32>
    %c0_6 = arith.constant 0 : index
    %c1 = arith.constant 1 : index
    %c0_7 = arith.constant 0 : index
    %7 = vector.load %arg1[%c0_6, %c1, %c0_7] : memref<1x18x72xf32, #tpu.memory_space<vmem>>, vector<1x16x72xf32>
    %8 = vector.shape_cast %7 : vector<1x16x72xf32> to vector<16x72xf32>
    %c1_8 = arith.constant 1 : index
    %c0_9 = arith.constant 0 : index
    %c0_10 = arith.constant 0 : index
    %9 = vector.load %arg2[%c1_8, %c0_9, %c0_10] : memref<3x72x128xf32, #tpu.memory_space<vmem>>, vector<1x72x128xf32>
    %10 = vector.shape_cast %9 : vector<1x72x128xf32> to vector<72x128xf32>
    %cst_11 = arith.constant dense<0.000000e+00> : vector<16x128xf32>
    %11 = tpu.matmul %8, %10, %cst_11 {dimension_numbers = #tpu.dot_dimension_numbers<[1], [0], [0], [1], [0, 0, 1, 1], [], []>} : vector<16x72xf32>, vector<72x128xf32>, vector<16x128xf32> -> vector<16x128xf32>
    %12 = arith.addf %6, %11 : vector<16x128xf32>
    %c0_12 = arith.constant 0 : index
    %c2 = arith.constant 2 : index
    %c0_13 = arith.constant 0 : index
    %13 = vector.load %arg1[%c0_12, %c2, %c0_13] : memref<1x18x72xf32, #tpu.memory_space<vmem>>, vector<1x16x72xf32>
    %14 = vector.shape_cast %13 : vector<1x16x72xf32> to vector<16x72xf32>
    %c2_14 = arith.constant 2 : index
    %c0_15 = arith.constant 0 : index
    %c0_16 = arith.constant 0 : index
    %15 = vector.load %arg2[%c2_14, %c0_15, %c0_16] : memref<3x72x128xf32, #tpu.memory_space<vmem>>, vector<1x72x128xf32>
    %16 = vector.shape_cast %15 : vector<1x72x128xf32> to vector<72x128xf32>
    %cst_17 = arith.constant dense<0.000000e+00> : vector<16x128xf32>
    %17 = tpu.matmul %14, %16, %cst_17 {dimension_numbers = #tpu.dot_dimension_numbers<[1], [0], [0], [1], [0, 0, 1, 1], [], []>} : vector<16x72xf32>, vector<72x128xf32>, vector<16x128xf32> -> vector<16x128xf32>
    %18 = arith.addf %12, %17 : vector<16x128xf32>
    %cst_18 = arith.constant 0.000000e+00 : f32
    %19 = vector.broadcast %cst_18 : f32 to vector<16x128xf32>
    %20 = arith.maximumf %18, %19 : vector<16x128xf32>
    %c0_19 = arith.constant 0 : index
    %c0_20 = arith.constant 0 : index
    %c0_21 = arith.constant 0 : index
    %21 = vector.load %arg3[%c0_19, %c0_20, %c0_21] : memref<1x16x128xf32, #tpu.memory_space<vmem>>, vector<1x16x128xf32>
    %22 = vector.shape_cast %21 : vector<1x16x128xf32> to vector<16x128xf32>
    %23 = vector.shape_cast %20 : vector<16x128xf32> to vector<1x16x128xf32>
    tpu.vector_store %arg3[%c0_19, %c0_20, %c0_21], %23 {strides = array<i32>} : memref<1x16x128xf32, #tpu.memory_space<vmem>>, vector<1x16x128xf32>,
    return
  }
  func.func @transform_0(%arg0: i32) -> (i32, i32, i32) {
    %c0_i32 = arith.constant 0 : i32
    %c0_i32_0 = arith.constant 0 : i32
    %c0_i32_1 = arith.constant 0 : i32
    return %arg0, %c0_i32, %c0_i32_0 : i32, i32, i32
  }
  func.func @transform_1(%arg0: i32) -> (i32, i32, i32) {
    %c0_i32 = arith.constant 0 : i32
    %c0_i32_0 = arith.constant 0 : i32
    %c0_i32_1 = arith.constant 0 : i32
    %c0_i32_2 = arith.constant 0 : i32
    return %c0_i32, %c0_i32_0, %c0_i32_1 : i32, i32, i32
  }
  func.func @transform_2(%arg0: i32) -> (i32, i32, i32) {
    %c0_i32 = arith.constant 0 : i32
    %c0_i32_0 = arith.constant 0 : i32
    %c0_i32_1 = arith.constant 0 : i32
    return %arg0, %c0_i32, %c0_i32_0 : i32, i32, i32
  }
}

</mosaic_0001>

<llo_original>
// kernel: tpu_custom_call.1
$region0: #{tpu_custom_call.1}
  #allocation0 [shape = 'u32[]', space=smem, size = 0x4, offset = 0x4, fixed_abs, tag = 'smem constant byte address 0x4 - core index']
  #allocation1 [shape = 'u32[144,128]{1,0:T(1,128)}', space=vmem, size = 0x12000, scoped, tag = 'internal scratch']
  %s0 = inlined_call_operand.vmem [shape: f32[2,18,72], index: 0, kind: input, shape index: {}]
  %s1 = inlined_call_operand.hbm [shape: f32[3,72,128], index: 1, kind: input, shape index: {}]
  %s2 = inlined_call_operand.hbm [shape: f32[2,16,128], index: 2, kind: output, shape index: {}]
  %s3 = sld [smem:[#allocation0]]
  $region45: #{tpu_custom_call.1} parent=0
    _
  %s5 = ssub.s32 1, %s3
  %s6 = scalar_select 0, %s5, %s3
  $region1: #{tpu_custom_call.1} parent=0
    #allocation2 [shape = 'u8[110592]{0}', space=vmem, size = 0x1b000, scoped, tag = 'input window, operand 1, single buffered']
    #allocation3 [shape = 's32[2]{0}', space=sflag, size = 0x8, scoped, tag = 'scoped memory for tpu_custom_call.1']
    #allocation4 [shape = 's32[2]{0}', space=sflag, size = 0x8, scoped, tag = 'scoped memory for tpu_custom_call.1']
    #allocation5 [shape = 'u8[16384]{0}', space=vmem, size = 0x4000, scoped, tag = 'output window, operand 0']
    %7 = vsyncpa [#allocation3], 0
    %8 = vsyncpa [#allocation4], 0
    %s9 = scalar_lea.sflag [#allocation4], 1
    %10 = vsyncpa %s9, 0
    loop: start=0, step=1, limit=4
    $region2: #{tpu_custom_call.1} parent=1 // loop_pre_header
      _
    $region3: #{tpu_custom_call.1} parent=1 // loop_header
      %s12 = sphi 0, %s16
      %p13 = scmp.ge.s32.totalorder %s12, 4
      %s22 = sphi 0, %s24
      %s25 = sphi 0, %s22
      %s26 = sphi 0, %s25
      %s42 = sphi 0, %s26
      %s46 = sphi 0, %s46
      %s48 = sphi 0, %s46
      %s49 = sphi 0, %s48
      %s63 = sphi 0, %s49
      %s69 = sphi 0, %s71
      %s72 = sphi 0, %s69
      %s73 = sphi 0, %s72
      %s89 = sphi 0, %s73
    $region4: #{tpu_custom_call.1} parent=1 // loop_header_branch
      %15 = sbr.rel (%p13) target = $region8
    $region5: #{tpu_custom_call.1} parent=1 // loop_body
      %s17 = ssub.s32 %s12, 1
      %s18 = ssub.s32 %s12, 2
      %s19 = sadd.s32 %s12, 1
      %s20 = ssub.s32 %s12, %s19
      %p21 = scmp.eq.s32.totalorder %s20, 0
      %s23 = sadd.s32 %s22, 1
      %s24 = scalar_select %p21, %s22, %s23
      %p27 = pneg %p21
      %p28 = scmp.eq.s32.totalorder %s12, 1
      %p29 = por %p27, %p28
      %p30 = scmp.ne.s32.totalorder %s22, %s25
      %p31 = scmp.eq.s32.totalorder %s12, 0
      %p32 = por %p30, %p31
      %p33 = scmp.ne.s32.totalorder %s22, %s25
      %p34 = scmp.eq.s32.totalorder %s17, 1
      %p35 = por %p33, %p34
      %p36 = scmp.ne.s32.totalorder %s25, %s26
      %p37 = scmp.eq.s32.totalorder %s17, 0
      %p38 = por %p36, %p37
      %p39 = scmp.ne.s32.totalorder %s25, %s26
      %p40 = scmp.eq.s32.totalorder %s18, 1
      %p41 = por %p39, %p40
      %p43 = scmp.ne.s32.totalorder %s26, %s42
      %p44 = scmp.eq.s32.totalorder %s18, 0
      %p45 = por %p43, %p44
      %s47 = sadd.s32 %s46, 1
      %p50 = scmp.eq.s32.totalorder %s12, 1
      %p51 = scmp.ne.s32.totalorder %s46, %s48
      %p52 = scmp.eq.s32.totalorder %s12, 0
      %p53 = por %p51, %p52
      %p54 = scmp.ne.s32.totalorder %s46, %s48
      %p55 = scmp.eq.s32.totalorder %s17, 1
      %p56 = por %p54, %p55
      %p57 = scmp.ne.s32.totalorder %s48, %s49
      %p58 = scmp.eq.s32.totalorder %s17, 0
      %p59 = por %p57, %p58
      %p60 = scmp.ne.s32.totalorder %s48, %s49
      %p61 = scmp.eq.s32.totalorder %s18, 1
      %p62 = por %p60, %p61
      %p64 = scmp.ne.s32.totalorder %s49, %s63
      %p65 = scmp.eq.s32.totalorder %s18, 0
      %p66 = por %p64, %p65
      %s67 = ssub.s32 %s12, %s19
      %p68 = scmp.eq.s32.totalorder %s67, 0
      %s70 = sadd.s32 %s69, 1
      %s71 = scalar_select %p68, %s69, %s70
      %p74 = pneg %p68
      %p75 = scmp.eq.s32.totalorder %s12, 1
      %p76 = por %p74, %p75
      %p77 = scmp.ne.s32.totalorder %s69, %s72
      %p78 = scmp.eq.s32.totalorder %s12, 0
      %p79 = por %p77, %p78
      %p80 = scmp.ne.s32.totalorder %s69, %s72
      %p81 = scmp.eq.s32.totalorder %s17, 1
      %p82 = por %p80, %p81
      %p83 = scmp.ne.s32.totalorder %s72, %s73
      %p84 = scmp.eq.s32.totalorder %s17, 0
      %p85 = por %p83, %p84
      %p86 = scmp.ne.s32.totalorder %s72, %s73
      %p87 = scmp.eq.s32.totalorder %s18, 1
      %p88 = por %p86, %p87
      %p90 = scmp.ne.s32.totalorder %s73, %s89
      %p91 = scmp.eq.s32.totalorder %s18, 0
      %p92 = por %p90, %p91
      %p93 = scmp.le.s32.totalorder 1, %s12
      %p94 = scmp.lt.s32.totalorder %s12, 3
      %p95 = pnand %p93, %p94
      %p96 = pneg %p95
      // Predicated region
      $region9: #{tpu_custom_call.1} parent=5 // pred_check
        _
      $region10: #{tpu_custom_call.1} parent=5 // pred_check_branch
        %98 = sbr.rel (%p95) target = $region12
      $region11: #{tpu_custom_call.1} parent=5 // pred_region
        %s99 = ssub.s32 %s12, 1
        // Predicated region
        $region13: #{tpu_custom_call.1} parent=11 // pred_check
          %p100 = pneg %p59
        $region14: #{tpu_custom_call.1} parent=11 // pred_check_branch
          %102 = sbr.rel (%p100) target = $region16
        $region15: #{tpu_custom_call.1} parent=11 // pred_region
          %s104 = ssub.s32 3456, 3456
          %105 = vsyncadd [#allocation3], %s104
          %s106 = sshll.u32 [#allocation2], 4
          %s107 = int_to_ptr.vmem [resolvable:$true] %s106
          %112 = dma.hbm_to_vmem [thread:$0]  %s1, 3456, %s107, [#allocation3], 128, 128, 8
        $region16: #{tpu_custom_call.1} parent=11 // pred_fallthru
          _
      $region12: #{tpu_custom_call.1} parent=5 // pred_fallthru
        _
      %p113 = scmp.lt.s32.totalorder %s12, 2
      // Predicated region
      $region17: #{tpu_custom_call.1} parent=5 // pred_check
        %p114 = pneg %p113
      $region18: #{tpu_custom_call.1} parent=5 // pred_check_branch
        %116 = sbr.rel (%p114) target = $region20
      $region19: #{tpu_custom_call.1} parent=5 // pred_region
        // Predicated region
        $region21: #{tpu_custom_call.1} parent=19 // pred_check
          %p117 = pneg %p32
        $region22: #{tpu_custom_call.1} parent=19 // pred_check_branch
          %119 = sbr.rel (%p117) target = $region24
        $region23: #{tpu_custom_call.1} parent=19 // pred_region
          %p120 = scmp.lt.s32.totalorder %s12, 1
          %s121 = scalar_select %p120, %s12, 1
          %s122 = smul.addr %s121, 3
          %s123 = smul.addr %s122, 8
          %s124 = scalar_lea.vmem %s0, %s123
        $region24: #{tpu_custom_call.1} parent=19 // pred_fallthru
          _
      $region20: #{tpu_custom_call.1} parent=5 // pred_fallthru
        _
      %p125 = scmp.le.s32.totalorder 1, %s12
      %p126 = scmp.lt.s32.totalorder %s12, 3
      %p127 = pnand %p125, %p126
      %p128 = pneg %p127
      // Predicated region
      $region25: #{tpu_custom_call.1} parent=5 // pred_check
        _
      $region26: #{tpu_custom_call.1} parent=5 // pred_check_branch
        %130 = sbr.rel (%p127) target = $region28
      $region27: #{tpu_custom_call.1} parent=5 // pred_region
        %s131 = ssub.s32 %s12, 1
        // Predicated region
        $region29: #{tpu_custom_call.1} parent=27 // pred_check
          %p132 = pneg %p59
        $region30: #{tpu_custom_call.1} parent=27 // pred_check_branch
          %134 = sbr.rel (%p132) target = $region32
        $region31: #{tpu_custom_call.1} parent=27 // pred_region
          %135 = dma.done [#allocation3], 3456
        $region32: #{tpu_custom_call.1} parent=27 // pred_fallthru
          _
        %p136 = scmp.lt.s32.totalorder %s17, 1
        %s137 = scalar_select %p136, %s17, 1
        %s138 = smul.addr %s137, 3
        %s139 = smul.addr %s138, 8
        %s140 = scalar_lea.vmem %s0, %s139
        %p141 = pneg %p38
        %p142 = pneg %p35
        %p143 = pneg %p59
        %p144 = pneg %p56
        %p145 = pneg %p85
        %p146 = pneg %p82
        %s147 = sand.u32 %s72, 1
        %s148 = scalar_lea.sflag [#allocation4], %s147
        %s149 = sand.u32 %s72, 1
        %s150 = smul.addr %s149, 16
        %s151 = scalar_lea.vmem [#allocation5], %s150
        %p152 = scmp.lt.s32.totalorder %s17, 1
        %s153 = scalar_select %p152, %s17, 1
        %s154 = smul.addr %s153, 3
        %s155 = smul.addr %s154, 8
        %s156 = scalar_lea.vmem %s0, %s155
        %v157 = vld [vmem:[%s156] sm:$0xff]
        %v158 = vld [vmem:[%s156 + $0x8] sm:$0xff]
        %v159 = vld [vmem:[#allocation2] sm:$0xff]
        %v160 = vld [vmem:[#allocation2 + $0x8] sm:$0xff]
        %v161 = vld [vmem:[#allocation2 + $0x10] sm:$0xff]
        %v162 = vld [vmem:[#allocation2 + $0x18] sm:$0xff]
        %v163 = vld [vmem:[#allocation2 + $0x20] sm:$0xff]
        %v164 = vld [vmem:[#allocation2 + $0x28] sm:$0xff]
        %v165 = vld [vmem:[#allocation2 + $0x30] sm:$0xff]
        %v166 = vld [vmem:[#allocation2 + $0x38] sm:$0xff]
        %v167 = vld [vmem:[#allocation2 + $0x40] sm:$0xff]
        %v168 = vld [vmem:[%s156 + $0x1] sm:$0xff]
        %v169 = vld [vmem:[%s156 + $0x9] sm:$0xff]
        %s170 = scalar_lea.vmem [#allocation2], 72
        %v171 = vld [vmem:[%s170] sm:$0xff]
        %v172 = vld [vmem:[%s170 + $0x8] sm:$0xff]
        %v173 = vld [vmem:[%s170 + $0x10] sm:$0xff]
        %v174 = vld [vmem:[%s170 + $0x18] sm:$0xff]
        %v175 = vld [vmem:[%s170 + $0x20] sm:$0xff]
        %v176 = vld [vmem:[%s170 + $0x28] sm:$0xff]
        %v177 = vld [vmem:[%s170 + $0x30] sm:$0xff]
        %v178 = vld [vmem:[%s170 + $0x38] sm:$0xff]
        %v179 = vld [vmem:[%s170 + $0x40] sm:$0xff]
        %vm180 = vcmask 588800
        %v182 = vsel %vm180, %v168, 0
        %v185 = vsel %vm180, %v169, 0
        %187 = vmatprep.subr.mxu0 0.0
        %188 = vmatpush1.msra.mxu0 %v171
        %189 = vmatprep.subr.mxu0 0.0
        %190 = vmatpush1.msra.mxu0 %v172
        %191 = vmatprep.subr.mxu0 0.0
        %192 = vmatpush1.msra.mxu0 %v173
        %193 = vmatprep.subr.mxu0 0.0
        %194 = vmatpush1.msra.mxu0 %v174
        %195 = vmatprep.subr.mxu0 0.0
        %196 = vmatpush1.msra.mxu0 %v175
        %197 = vmatprep.subr.mxu0 0.0
        %198 = vmatpush1.msra.mxu0 %v176
        %199 = vmatprep.subr.mxu0 0.0
        %200 = vmatpush1.msra.mxu0 %v177
        %201 = vmatprep.subr.mxu0 0.0
        %202 = vmatpush1.msra.mxu0 %v178
        %203 = vmatprep.subr.mxu0 0.0
        %204 = vmatpush1.msra.mxu0 %v179
        %205 = vmatprep.subr.mxu0 0.0
        %206 = vmatpush1.msra.mxu0 0.0
        %207 = vmatprep.subr.mxu0 0.0
        %208 = vmatpush1.msra.mxu0 0.0
        %209 = vmatprep.subr.mxu0 0.0
        %210 = vmatpush1.msra.mxu0 0.0
        %211 = vmatprep.subr.mxu0 0.0
        %212 = vmatpush1.msra.mxu0 0.0
        %213 = vmatprep.subr.mxu0 0.0
        %214 = vmatpush1.msra.mxu0 0.0
        %215 = vmatprep.subr.mxu0 0.0
        %216 = vmatpush1.msra.mxu0 0.0
        %217 = vmatprep.subr.mxu0 0.0
        %218 = vmatpush1.msra.mxu0 0.0
        %219 = vmatprep.subr.mxu0 0.0
        %220 = vmatpush1.msra.mxu0 0.0
        %221 = vmatprep.subr.mxu0 0.0
        %222 = vmatpush1.msra.mxu0 0.0
        %223 = vmatprep.subr.mxu0 0.0
        %224 = vmatpush1.msra.mxu0 0.0
        %225 = vmatprep.subr.mxu0 0.0
        %226 = vmatpush1.msra.mxu0 0.0
        %227 = vmatprep.subr.mxu0 0.0
        %228 = vmatpush1.msra.mxu0 0.0
        %229 = vmatprep.subr.mxu0 0.0
        %230 = vmatpush1.msra.mxu0 0.0
        %231 = vmatprep.subr.mxu0 0.0
        %232 = vmatpush1.msra.mxu0 0.0
        %233 = vmatprep.subr.mxu0 0.0
        %234 = vmatpush1.msra.mxu0 0.0
        %235 = vmatprep.subr.mxu0 0.0
        %236 = vmatpush1.msra.mxu0 0.0
        %237 = vmatprep.subr.mxu0 0.0
        %238 = vmatpush1.msra.mxu0 0.0
        %239 = vmatprep.subr.mxu0 0.0
        %240 = vmatpush1.msra.mxu0 0.0
        %241 = vmatprep.subr.mxu0 0.0
        %242 = vmatpush1.msra.mxu0 0.0
        %243 = vmatprep.subr.mxu0 0.0
        %244 = vmatpush1.msra.mxu0 0.0
        %245 = vmatprep.subr.mxu0 0.0
        %246 = vmatpush1.msra.mxu0 0.0
        %247 = vmatprep.subr.mxu0 0.0
        %248 = vmatpush1.msra.mxu0 0.0
        %249 = vmatprep.subr.mxu0 0.0
        %250 = vmatpush1.msra.mxu0 0.0
        %251 = vmatprep.mubr.f32.mxu0 0.0
        %252 = vmatmul.mubr.f32.gmra.mrb[0].mxu0 %v182
        %v253 = vpop.f32.mrb[0].mxu0
        %v254 = vadd.f32 0.0, %v253
        %v255 = vpop.f32.mrb[0].mxu0
        %256 = vmatprep.mubr.f32.mxu0 0.0
        %257 = vmatmul.mubr.f32.gmra.mrb[0].mxu0 %v185
        %v258 = vpop.f32.mrb[0].mxu0
        %v259 = vadd.f32 0.0, %v258
        %v260 = vpop.f32.mrb[0].mxu0
        %261 = vdwg.mxu0
        %v263 = vsel %vm180, %v157, 0
        %v266 = vsel %vm180, %v158, 0
        %268 = vmatprep.subr.mxu0 0.0
        %269 = vmatpush1.msra.mxu0 %v159
        %270 = vmatprep.subr.mxu0 0.0
        %271 = vmatpush1.msra.mxu0 %v160
        %272 = vmatprep.subr.mxu0 0.0
        %273 = vmatpush1.msra.mxu0 %v161
        %274 = vmatprep.subr.mxu0 0.0
        %275 = vmatpush1.msra.mxu0 %v162
        %276 = vmatprep.subr.mxu0 0.0
        %277 = vmatpush1.msra.mxu0 %v163
        %278 = vmatprep.subr.mxu0 0.0
        %279 = vmatpush1.msra.mxu0 %v164
        %280 = vmatprep.subr.mxu0 0.0
        %281 = vmatpush1.msra.mxu0 %v165
        %282 = vmatprep.subr.mxu0 0.0
        %283 = vmatpush1.msra.mxu0 %v166
        %284 = vmatprep.subr.mxu0 0.0
        %285 = vmatpush1.msra.mxu0 %v167
        %286 = vmatprep.subr.mxu0 0.0
        %287 = vmatpush1.msra.mxu0 0.0
        %288 = vmatprep.subr.mxu0 0.0
        %289 = vmatpush1.msra.mxu0 0.0
        %290 = vmatprep.subr.mxu0 0.0
        %291 = vmatpush1.msra.mxu0 0.0
        %292 = vmatprep.subr.mxu0 0.0
        %293 = vmatpush1.msra.mxu0 0.0
        %294 = vmatprep.subr.mxu0 0.0
        %295 = vmatpush1.msra.mxu0 0.0
        %296 = vmatprep.subr.mxu0 0.0
        %297 = vmatpush1.msra.mxu0 0.0
        %298 = vmatprep.subr.mxu0 0.0
        %299 = vmatpush1.msra.mxu0 0.0
        %300 = vmatprep.subr.mxu0 0.0
        %301 = vmatpush1.msra.mxu0 0.0
        %302 = vmatprep.subr.mxu0 0.0
        %303 = vmatpush1.msra.mxu0 0.0
        %304 = vmatprep.subr.mxu0 0.0
        %305 = vmatpush1.msra.mxu0 0.0
        %306 = vmatprep.subr.mxu0 0.0
        %307 = vmatpush1.msra.mxu0 0.0
        %308 = vmatprep.subr.mxu0 0.0
        %309 = vmatpush1.msra.mxu0 0.0
        %310 = vmatprep.subr.mxu0 0.0
        %311 = vmatpush1.msra.mxu0 0.0
        %312 = vmatprep.subr.mxu0 0.0
        %313 = vmatpush1.msra.mxu0 0.0
        %314 = vmatprep.subr.mxu0 0.0
        %315 = vmatpush1.msra.mxu0 0.0
        %316 = vmatprep.subr.mxu0 0.0
        %317 = vmatpush1.msra.mxu0 0.0
        %318 = vmatprep.subr.mxu0 0.0
        %319 = vmatpush1.msra.mxu0 0.0
        %320 = vmatprep.subr.mxu0 0.0
        %321 = vmatpush1.msra.mxu0 0.0
        %322 = vmatprep.subr.mxu0 0.0
        %323 = vmatpush1.msra.mxu0 0.0
        %324 = vmatprep.subr.mxu0 0.0
        %325 = vmatpush1.msra.mxu0 0.0
        %326 = vmatprep.subr.mxu0 0.0
        %327 = vmatpush1.msra.mxu0 0.0
        %328 = vmatprep.subr.mxu0 0.0
        %329 = vmatpush1.msra.mxu0 0.0
        %330 = vmatprep.subr.mxu0 0.0
        %331 = vmatpush1.msra.mxu0 0.0
        %332 = vmatprep.mubr.f32.mxu0 0.0
        %333 = vmatmul.mubr.f32.gmra.mrb[0].mxu0 %v263
        %v334 = vpop.f32.mrb[0].mxu0
        %v335 = vadd.f32 %v254, %v334
        %v336 = vpop.f32.mrb[0].mxu0
        %337 = vmatprep.mubr.f32.mxu0 0.0
        %338 = vmatmul.mubr.f32.gmra.mrb[0].mxu0 %v266
        %v339 = vpop.f32.mrb[0].mxu0
        %v340 = vadd.f32 %v259, %v339
        %v341 = vpop.f32.mrb[0].mxu0
        %342 = vdwg.mxu0
        %v343 = vld [vmem:[%s156 + $0x2] sm:$0xff]
        %v344 = vld [vmem:[%s156 + $0xa] sm:$0xff]
        %s345 = scalar_lea.vmem [#allocation2], 144
        %v346 = vld [vmem:[%s345] sm:$0xff]
        %v347 = vld [vmem:[%s345 + $0x8] sm:$0xff]
        %v348 = vld [vmem:[%s345 + $0x10] sm:$0xff]
        %v349 = vld [vmem:[%s345 + $0x18] sm:$0xff]
        %v350 = vld [vmem:[%s345 + $0x20] sm:$0xff]
        %v351 = vld [vmem:[%s345 + $0x28] sm:$0xff]
        %v352 = vld [vmem:[%s345 + $0x30] sm:$0xff]
        %v353 = vld [vmem:[%s345 + $0x38] sm:$0xff]
        %v354 = vld [vmem:[%s345 + $0x40] sm:$0xff]
        %v356 = vsel %vm180, %v343, 0
        %v359 = vsel %vm180, %v344, 0
        %361 = vmatprep.subr.mxu0 0.0
        %362 = vmatpush1.msra.mxu0 %v346
        %363 = vmatprep.subr.mxu0 0.0
        %364 = vmatpush1.msra.mxu0 %v347
        %365 = vmatprep.subr.mxu0 0.0
        %366 = vmatpush1.msra.mxu0 %v348
        %367 = vmatprep.subr.mxu0 0.0
        %368 = vmatpush1.msra.mxu0 %v349
        %369 = vmatprep.subr.mxu0 0.0
        %370 = vmatpush1.msra.mxu0 %v350
        %371 = vmatprep.subr.mxu0 0.0
        %372 = vmatpush1.msra.mxu0 %v351
        %373 = vmatprep.subr.mxu0 0.0
        %374 = vmatpush1.msra.mxu0 %v352
        %375 = vmatprep.subr.mxu0 0.0
        %376 = vmatpush1.msra.mxu0 %v353
        %377 = vmatprep.subr.mxu0 0.0
        %378 = vmatpush1.msra.mxu0 %v354
        %379 = vmatprep.subr.mxu0 0.0
        %380 = vmatpush1.msra.mxu0 0.0
        %381 = vmatprep.subr.mxu0 0.0
        %382 = vmatpush1.msra.mxu0 0.0
        %383 = vmatprep.subr.mxu0 0.0
        %384 = vmatpush1.msra.mxu0 0.0
        %385 = vmatprep.subr.mxu0 0.0
        %386 = vmatpush1.msra.mxu0 0.0
        %387 = vmatprep.subr.mxu0 0.0
        %388 = vmatpush1.msra.mxu0 0.0
        %389 = vmatprep.subr.mxu0 0.0
        %390 = vmatpush1.msra.mxu0 0.0
        %391 = vmatprep.subr.mxu0 0.0
        %392 = vmatpush1.msra.mxu0 0.0
        %393 = vmatprep.subr.mxu0 0.0
        %394 = vmatpush1.msra.mxu0 0.0
        %395 = vmatprep.subr.mxu0 0.0
        %396 = vmatpush1.msra.mxu0 0.0
        %397 = vmatprep.subr.mxu0 0.0
        %398 = vmatpush1.msra.mxu0 0.0
        %399 = vmatprep.subr.mxu0 0.0
        %400 = vmatpush1.msra.mxu0 0.0
        %401 = vmatprep.subr.mxu0 0.0
        %402 = vmatpush1.msra.mxu0 0.0
        %403 = vmatprep.subr.mxu0 0.0
        %404 = vmatpush1.msra.mxu0 0.0
        %405 = vmatprep.subr.mxu0 0.0
        %406 = vmatpush1.msra.mxu0 0.0
        %407 = vmatprep.subr.mxu0 0.0
        %408 = vmatpush1.msra.mxu0 0.0
        %409 = vmatprep.subr.mxu0 0.0
        %410 = vmatpush1.msra.mxu0 0.0
        %411 = vmatprep.subr.mxu0 0.0
        %412 = vmatpush1.msra.mxu0 0.0
        %413 = vmatprep.subr.mxu0 0.0
        %414 = vmatpush1.msra.mxu0 0.0
        %415 = vmatprep.subr.mxu0 0.0
        %416 = vmatpush1.msra.mxu0 0.0
        %417 = vmatprep.subr.mxu0 0.0
        %418 = vmatpush1.msra.mxu0 0.0
        %419 = vmatprep.subr.mxu0 0.0
        %420 = vmatpush1.msra.mxu0 0.0
        %421 = vmatprep.subr.mxu0 0.0
        %422 = vmatpush1.msra.mxu0 0.0
        %423 = vmatprep.subr.mxu0 0.0
        %424 = vmatpush1.msra.mxu0 0.0
        %425 = vmatprep.mubr.f32.mxu0 0.0
        %426 = vmatmul.mubr.f32.gmra.mrb[0].mxu0 %v356
        %v427 = vpop.f32.mrb[0].mxu0
        %v428 = vadd.f32 0.0, %v427
        %v429 = vpop.f32.mrb[0].mxu0
        %430 = vmatprep.mubr.f32.mxu0 0.0
        %431 = vmatmul.mubr.f32.gmra.mrb[0].mxu0 %v359
        %v432 = vpop.f32.mrb[0].mxu0
        %v433 = vadd.f32 0.0, %v432
        %v434 = vpop.f32.mrb[0].mxu0
        %435 = vdwg.mxu0
        %v436 = vadd.f32 %v335, %v428
        %v437 = vadd.f32 %v340, %v433
        %v438 = vmax.f32 %v436, 0.0
        %v439 = vmax.f32 %v437, 0.0
        %440 = vst [vmem:[%s151] sm:$0xff] %v438
        %441 = vst [vmem:[%s151 + $0x8] sm:$0xff] %v439
        %s442 = sand.u32 %s72, 1
        %s443 = scalar_lea.sflag [#allocation4], %s442
        %s444 = sand.u32 %s72, 1
        %s445 = smul.addr %s444, 16
        %s446 = scalar_lea.vmem [#allocation5], %s445
        // Predicated region
        $region33: #{tpu_custom_call.1} parent=27 // pred_check
          %p447 = pneg %p82
        $region34: #{tpu_custom_call.1} parent=27 // pred_check_branch
          %449 = sbr.rel (%p447) target = $region36
        $region35: #{tpu_custom_call.1} parent=27 // pred_region
          %s451 = ssub.s32 256, 256
          %452 = vsyncadd %s443, %s451
          %s453 = smul.addr %s17, 2
          %s454 = smul.addr %s453, 128
          %s455 = scalar_lea.hbm %s2, %s454
          %s456 = sshll.u32 %s446, 4
          %s457 = int_to_ptr.vmem [resolvable:$true] %s456
          %462 = dma.vmem_to_hbm [thread:$0]  %s457, 256, %s455, %s443, 128, 128, 8
        $region36: #{tpu_custom_call.1} parent=27 // pred_fallthru
          _
      $region28: #{tpu_custom_call.1} parent=5 // pred_fallthru
        _
      %p463 = scmp.le.s32.totalorder 2, %s12
      // Predicated region
      $region37: #{tpu_custom_call.1} parent=5 // pred_check
        %p464 = pneg %p463
      $region38: #{tpu_custom_call.1} parent=5 // pred_check_branch
        %466 = sbr.rel (%p464) target = $region40
      $region39: #{tpu_custom_call.1} parent=5 // pred_region
        %s467 = ssub.s32 %s12, 2
        // Predicated region
        $region41: #{tpu_custom_call.1} parent=39 // pred_check
          %p468 = pneg %p88
        $region42: #{tpu_custom_call.1} parent=39 // pred_check_branch
          %470 = sbr.rel (%p468) target = $region44
        $region43: #{tpu_custom_call.1} parent=39 // pred_region
          %s471 = sand.u32 %s73, 1
          %s472 = scalar_lea.sflag [#allocation4], %s471
          %s473 = sand.u32 %s73, 1
          %s474 = smul.addr %s473, 16
          %s475 = scalar_lea.vmem [#allocation5], %s474
          %476 = dma.done %s472, 256
        $region44: #{tpu_custom_call.1} parent=39 // pred_fallthru
          _
      $region40: #{tpu_custom_call.1} parent=5 // pred_fallthru
        _
    $region6: #{tpu_custom_call.1} parent=1 // loop_footer
      %s16 = sadd.s32 1, %s12
    $region7: #{tpu_custom_call.1} parent=1 // loop_footer_branch
      %11 = sbr.rel target = $region3
    $region8: #{tpu_custom_call.1} parent=1 // loop_exit
      _
    %477 = vsyncpa [#allocation3], 1
    %s478 = scalar_lea.sflag [#allocation3], 1
    %479 = vsyncpa %s478, 1
    %480 = vsyncpa [#allocation4], 1
    %s481 = scalar_lea.sflag [#allocation4], 1
    %482 = vsyncpa %s481, 1

</llo_original>
